<compile_context>
chip_gen: v6e
topology: v6e:2x2x1
jax: 0.10.0
libtpu: 0.0.40
codegen_flags: <defaults>
</compile_context>

<pallas_src>
import functools

import jax
import jax.numpy as jnp
from jax.experimental import pallas as pl
from jax.experimental.pallas import tpu as pltpu


def _round_up(x, m):
    return ((x + m - 1) // m) * m


def _supcon_tile_kernel(*refs, has_mask, temp_over_base, n_valid, pad_exists):
    """One (TA x TN) tile of the SupCon loss with online masked log-sum-exp.

    refs (has_mask=False):
        row_lab_ref [TA,1] i32, col_lab_ref [1,TN] i32, inv_cnt_ref [TA,1] f32,
        anchor_ref [TA,D] bf16, contrast_ref [TN,D] bf16, out_ref [TA,1] f32,
        m_sc, l_sc, ps_sc : [TA,1] f32 VMEM scratch
    refs (has_mask=True): mask_ref [TA,TN] bf16 replaces the two label refs.
    """
    if has_mask:
        (mask_ref, inv_cnt_ref, anchor_ref, contrast_ref, out_ref,
         m_sc, l_sc, ps_sc) = refs
    else:
        (row_lab_ref, col_lab_ref, inv_cnt_ref, anchor_ref, contrast_ref, out_ref,
         m_sc, l_sc, ps_sc) = refs

    i = pl.program_id(0)               # anchor-row tile
    j = pl.program_id(1)               # contrast-column tile (reduction axis, last)
    ta = anchor_ref.shape[0]
    tn = contrast_ref.shape[0]

    @pl.when(j == 0)
    def _():
        m_sc[...] = jnp.full_like(m_sc, -jnp.inf)
        l_sc[...] = jnp.zeros_like(l_sc)
        ps_sc[...] = jnp.zeros_like(ps_sc)

    # MXU: bf16 x bf16 -> f32, contracting the last dim of both operands (no
    # transpose). Anchors are pre-scaled by 1/T, so adc already is the logits.
    adc = jax.lax.dot_general(
        anchor_ref[...], contrast_ref[...],
        dimension_numbers=(((1,), (1,)), ((), ())),
        preferred_element_type=jnp.float32,
    )                                                   # [TA, TN] f32 logits

    neg_inf = jnp.float32(-jnp.inf)

    def update(masked, pos, guard_all_masked):
        # Online (flash-style) masked log-sum-exp + positive-pair logit sum.
        m_prev = m_sc[...]
        m_new = jnp.maximum(m_prev, jnp.max(masked, axis=1, keepdims=True))
        if guard_all_masked:
            m_use = jnp.where(m_new == neg_inf, jnp.float32(0.0), m_new)
        else:
            m_use = m_new                               # adc is always finite here
        p = jnp.exp(masked - m_use)                     # one exp per (i,j) pass
        l_sc[...] = (l_sc[...] * jnp.exp(m_prev - m_use)
                     + jnp.sum(p, axis=1, keepdims=True))
        m_sc[...] = m_new
        # pos is already zero on masked columns, so multiply by the raw adc
        # (never by the -inf-masked logits).
        ps_sc[...] = ps_sc[...] + jnp.sum(pos * adc, axis=1, keepdims=True)

    # Scalar predicates: does this tile touch the self-pair diagonal and/or the
    # padded tail columns?  Interior tiles skip all mask construction.
    row0 = i * ta
    col0 = j * tn
    diag_overlap = jnp.logical_and(row0 < col0 + tn, col0 < row0 + ta)
    if pad_exists:
        need_full = jnp.logical_or(diag_overlap, j == pl.num_programs(1) - 1)
    else:
        need_full = diag_overlap

    @pl.when(jnp.logical_not(need_full))
    def _():
        # Fast path: no self column, no padded columns in this tile.
        if has_mask:
            pos = mask_ref[...].astype(jnp.float32)
        else:
            pos = (row_lab_ref[...] == col_lab_ref[...]).astype(jnp.float32)
        update(adc, pos, guard_all_masked=False)

    @pl.when(need_full)
    def _():
        # Full path: drop the self column (logits_mask) and padded columns.
        row_ids = row0 + jax.lax.broadcasted_iota(jnp.int32, (ta, 1), 0)
        col_ids = col0 + jax.lax.broadcasted_iota(jnp.int32, (1, tn), 1)
        lmask = jnp.logical_and(row_ids != col_ids, col_ids < n_valid)
        if has_mask:
            pos = mask_ref[...].astype(jnp.float32) * lmask.astype(jnp.float32)
        else:
            pos = jnp.logical_and(row_lab_ref[...] == col_lab_ref[...],
                                  lmask).astype(jnp.float32)
        masked = jnp.where(lmask, adc, neg_inf)
        update(masked, pos, guard_all_masked=True)

    @pl.when(j == pl.num_programs(1) - 1)
    def _():
        # log_prob = logits - LSE  =>  mean_log_prob_pos = ps * (1/cnt) - LSE
        lse = m_sc[...] + jnp.log(l_sc[...])
        mean_log_prob_pos = ps_sc[...] * inv_cnt_ref[...]
        out_ref[...] = (-temp_over_base * (mean_log_prob_pos - lse)).astype(out_ref.dtype)


def supcon_loss(features, labels=None, mask=None, *,
                temperature=0.1, contrast_mode='all', base_temperature=0.07):
    """JAX/Pallas equivalent of SupConLoss.forward."""
    if features.ndim < 3:
        raise ValueError('`features` needs to be [bsz, n_views, ...]')
    bsz = features.shape[0]
    n_views = features.shape[1]
    feats = features.reshape(bsz, n_views, -1).astype(jnp.float32)
    dim = feats.shape[-1]

    if labels is not None and mask is not None:
        raise ValueError('Cannot define both `labels` and `mask`')
    has_mask = mask is not None
    if labels is None and mask is None:
        # SimCLR degenerate case: eye(bsz) == label-equality over unique ids.
        labels = jnp.arange(bsz, dtype=jnp.int32)
    if not has_mask:
        labels = jnp.asarray(labels).reshape(-1).astype(jnp.int32)
        if labels.shape[0] != bsz:
            raise ValueError('Num of labels does not match num of features')

    contrast_count = n_views
    # torch.cat(torch.unbind(features, dim=1), dim=0): view-major stacking.
    contrast_feature = jnp.swapaxes(feats, 0, 1).reshape(n_views * bsz, dim)

    if contrast_mode == 'one':
        anchor_feature = feats[:, 0]
        anchor_count = 1
    elif contrast_mode == 'all':
        anchor_feature = contrast_feature
        anchor_count = contrast_count
    else:
        raise ValueError(f'Unknown mode: {contrast_mode}')

    A = anchor_count * bsz          # number of anchors
    N = contrast_count * bsz        # number of contrast samples

    # ---- tile sizing (lane/sublane aligned, VMEM-budgeted) ----
    D_pad = _round_up(dim, 128)
    TA = min(_round_up(A, 16), 512)                 # 16: bf16 sublane pack
    A_pad = _round_up(A, TA)
    # contrast bf16 tile <= ~2 MiB (double-buffered) and ~5 live f32 [TA,TN]
    # temporaries <= ~16 MiB -> total comfortably under the explicit 48 MiB
    # vmem limit below on all of v5e / v6e / v7x.
    tn_cap_dma = max(128, ((2 << 20) // (2 * D_pad)) // 128 * 128)
    tn_cap_tmp = max(128, ((16 << 20) // (20 * TA)) // 128 * 128)
    TN = min(_round_up(N, 128), 2048, tn_cap_dma, tn_cap_tmp)
    # Prefer a TN that divides N so the padded-tail branch disappears entirely.
    if N % TN != 0 and N % 128 == 0:
        for cand in range(TN, max(127, TN // 2 - 1), -128):
            if N % cand == 0:
                TN = cand
                break
    N_pad = _round_up(N, TN)
    pad_exists = (N_pad != N)

    inv_t = jnp.float32(1.0 / temperature)

    def pad2(x, r, c):
        return jnp.pad(x, ((0, r - x.shape[0]), (0, c - x.shape[1])))

    # 1/temperature folded into the anchor bf16 cast (fused into the existing
    # pad/cast XLA op) -> no per-logit multiply inside the kernel.
    anchor_p = pad2(anchor_feature * inv_t, A_pad, D_pad).astype(jnp.bfloat16)
    contrast_p = pad2(contrast_feature, N_pad, D_pad).astype(jnp.bfloat16)

    # Per-anchor positive counts precomputed here (O(bsz^2)), so the kernel
    # carries no sum(mask) accumulator / cross-lane reduction for it.
    if has_mask:
        m32 = jnp.asarray(mask, dtype=jnp.float32)
        cnt_b = jnp.sum(m32, axis=1) * contrast_count - jnp.diagonal(m32)
    else:
        same = labels[:, None] == labels[None, :]
        cnt_b = jnp.sum(same, axis=1).astype(jnp.float32) * contrast_count - 1.0
    row_cnt = jnp.tile(cnt_b, anchor_count)                        # [A]
    # Zero-positive anchors -> inf -> NaN loss (matches the PyTorch 0/0).
    inv_cnt = jnp.pad(1.0 / row_cnt, (0, A_pad - A),
                      constant_values=1.0).reshape(A_pad, 1).astype(jnp.float32)

    kernel = functools.partial(
        _supcon_tile_kernel,
        has_mask=has_mask,
        temp_over_base=float(temperature / base_temperature),
        n_valid=int(N),
        pad_exists=pad_exists,
    )

    if has_mask:
        # Explicit user mask path: stream the tiled [A,N] 0/1 mask as bf16
        # (exact for 0/1 values; halves HBM traffic and VMEM double-buffer).
        mask_full = jnp.tile(m32, (anchor_count, contrast_count))
        mask_p = pad2(mask_full, A_pad, N_pad).astype(jnp.bfloat16)
        in_specs = [
            pl.BlockSpec((TA, TN), lambda i, j: (i, j)),        # positive mask tile
            pl.BlockSpec((TA, 1), lambda i, j: (i, 0)),         # 1/positive-count
            pl.BlockSpec((TA, D_pad), lambda i, j: (i, 0)),     # anchor tile
            pl.BlockSpec((TN, D_pad), lambda i, j: (j, 0)),     # contrast tile
        ]
        args = (mask_p, inv_cnt, anchor_p, contrast_p)
    else:
        # Labels / SimCLR path: only O(A + N) label metadata goes to the kernel.
        row_labels = jnp.tile(labels, anchor_count)
        col_labels = jnp.tile(labels, contrast_count)
        row_lab = jnp.pad(row_labels, (0, A_pad - A),
                          constant_values=-1).reshape(A_pad, 1).astype(jnp.int32)
        col_lab = jnp.pad(col_labels, (0, N_pad - N),
                          constant_values=-1).reshape(1, N_pad).astype(jnp.int32)
        in_specs = [
            pl.BlockSpec((TA, 1), lambda i, j: (i, 0)),         # row (anchor) labels
            pl.BlockSpec((1, TN), lambda i, j: (0, j)),         # col (contrast) labels
            pl.BlockSpec((TA, 1), lambda i, j: (i, 0)),         # 1/positive-count
            pl.BlockSpec((TA, D_pad), lambda i, j: (i, 0)),     # anchor tile
            pl.BlockSpec((TN, D_pad), lambda i, j: (j, 0)),     # contrast tile
        ]
        args = (row_lab, col_lab, inv_cnt, anchor_p, contrast_p)

    per_anchor = pl.pallas_call(
        kernel,
        out_shape=jax.ShapeDtypeStruct((A_pad, 1), jnp.float32),
        grid=(A_pad // TA, N_pad // TN),
        in_specs=in_specs,
        out_specs=pl.BlockSpec((TA, 1), lambda i, j: (i, 0)),
        scratch_shapes=[pltpu.VMEM((TA, 1), jnp.float32),   # running max
                        pltpu.VMEM((TA, 1), jnp.float32),   # running exp-sum
                        pltpu.VMEM((TA, 1), jnp.float32)],  # running sum(mask*logits)
        compiler_params=pltpu.CompilerParams(
            dimension_semantics=("parallel", "arbitrary"),
            vmem_limit_bytes=48 << 20),
    )(*args)

    # loss.view(anchor_count, batch_size).mean() == mean over all A anchors.
    return jnp.mean(per_anchor[:A, 0])


def _reference_supcon(features, labels=None, mask=None, *,
                      temperature, contrast_mode='all', base_temperature=0.07):
    """Pure-JAX port of the PyTorch forward, using the same bf16 feed as the kernel."""
    bsz, n_views = features.shape[0], features.shape[1]
    feats = features.reshape(bsz, n_views, -1).astype(jnp.float32)
    if labels is None and mask is None:
        mask = jnp.eye(bsz, dtype=jnp.float32)
    elif labels is not None:
        labels = jnp.asarray(labels).reshape(-1, 1)
        mask = (labels == labels.T).astype(jnp.float32)
    else:
        mask = jnp.asarray(mask, dtype=jnp.float32)
    cf = jnp.swapaxes(feats, 0, 1).reshape(n_views * bsz, -1)
    if contrast_mode == 'one':
        af = feats[:, 0]
        anchor_count = 1
    else:
        af = cf
        anchor_count = n_views
    # Mirror the kernel's quantization: 1/T folded into the anchor bf16 cast.
    inv_t = jnp.float32(1.0 / temperature)
    af_q = (af * inv_t).astype(jnp.bfloat16).astype(jnp.float32)
    cf_q = cf.astype(jnp.bfloat16).astype(jnp.float32)
    adc = af_q @ cf_q.T
    logits = adc - jnp.max(adc, axis=1, keepdims=True)
    mask = jnp.tile(mask, (anchor_count, n_views))
    A = anchor_count * bsz
    lmask = jnp.ones_like(mask).at[jnp.arange(A), jnp.arange(A)].set(0.0)
    mask = mask * lmask
    exp_logits = jnp.exp(logits) * lmask
    log_prob = logits - jnp.log(exp_logits.sum(1, keepdims=True))
    mlpp = (mask * log_prob).sum(1) / mask.sum(1)
    return (-(temperature / base_temperature) * mlpp).mean()


if __name__ == "__main__":
    key = jax.random.PRNGKey(0)
    k1, k2 = jax.random.split(key)

    bsz, n_views, feat_dim = 8, 2, 32
    features = jax.random.normal(k1, (bsz, n_views, feat_dim), dtype=jnp.float32)
    features = features / jnp.linalg.norm(features, axis=-1, keepdims=True)
    labels = jax.random.randint(k2, (bsz,), 0, 4)

    temperature, base_temperature = 0.1, 0.07

    # supervised, contrast_mode='all'
    loss = jax.block_until_ready(
        supcon_loss(features, labels=labels, temperature=temperature,
                    contrast_mode='all', base_temperature=base_temperature))
    ref = _reference_supcon(features, labels=labels, temperature=temperature,
                            contrast_mode='all', base_temperature=base_temperature)
    assert jnp.isfinite(loss), "loss is not finite"
    assert jnp.allclose(loss, ref, rtol=5e-3, atol=5e-3), (loss, ref)

    # unsupervised (SimCLR) path
    loss_u = jax.block_until_ready(
        supcon_loss(features, temperature=temperature,
                    base_temperature=base_temperature))
    ref_u = _reference_supcon(features, temperature=temperature,
                              base_temperature=base_temperature)
    assert jnp.allclose(loss_u, ref_u, rtol=5e-3, atol=5e-3), (loss_u, ref_u)

    # contrast_mode='one'
    loss_o = jax.block_until_ready(
        supcon_loss(features, labels=labels, temperature=temperature,
                    contrast_mode='one', base_temperature=base_temperature))
    ref_o = _reference_supcon(features, labels=labels, temperature=temperature,
                              contrast_mode='one', base_temperature=base_temperature)
    assert jnp.allclose(loss_o, ref_o, rtol=5e-3, atol=5e-3), (loss_o, ref_o)

    # explicit-mask path (mask equivalent to label equality -> same loss)
    mask_in = (labels.reshape(-1, 1) == labels.reshape(1, -1)).astype(jnp.float32)
    loss_m = jax.block_until_ready(
        supcon_loss(features, mask=mask_in, temperature=temperature,
                    base_temperature=base_temperature))
    assert jnp.allclose(loss_m, ref, rtol=5e-3, atol=5e-3), (loss_m, ref)

    print("KERNEL_OK")
</pallas_src>

<mosaic_0001>
module attributes {stable_mosaic.version = 11 : i64} {
  func.func @_supcon_tile_kernel(%arg0: i32, %arg1: i32, %arg2: memref<16x1xi32, #tpu.memory_space<vmem>>, %arg3: memref<1x128xi32, #tpu.memory_space<vmem>>, %arg4: memref<16x1xf32, #tpu.memory_space<vmem>>, %arg5: memref<16x128xbf16, #tpu.memory_space<vmem>>, %arg6: memref<128x128xbf16, #tpu.memory_space<vmem>>, %arg7: memref<16x1xf32, #tpu.memory_space<vmem>>, %arg8: memref<16x1xf32, #tpu.memory_space<vmem>>, %arg9: memref<16x1xf32, #tpu.memory_space<vmem>>, %arg10: memref<16x1xf32, #tpu.memory_space<vmem>>) attributes {dimension_semantics = [#tpu.dimension_semantics<parallel>, #tpu.dimension_semantics<arbitrary>], iteration_bounds = array<i64: 1, 1>, scalar_prefetch = 0 : i64, scratch_operands = 3 : i64, tpu.core_type = #tpu.core_type<tc>, window_params = [{transform_indices = @transform_0, window_bounds = array<i64: 16, 1>}, {transform_indices = @transform_1, window_bounds = array<i64: 1, 128>}, {transform_indices = @transform_2, window_bounds = array<i64: 16, 1>}, {transform_indices = @transform_3, window_bounds = array<i64: 16, 128>}, {transform_indices = @transform_4, window_bounds = array<i64: 128, 128>}, {transform_indices = @transform_5, window_bounds = array<i64: 16, 1>}]} {
    %c0_i32 = arith.constant 0 : i32
    %0 = arith.cmpi eq, %arg1, %c0_i32 : i32
    %1 = arith.extui %0 : i1 to i32
    %c0_i32_0 = arith.constant 0 : i32
    %2 = arith.cmpi ne, %1, %c0_i32_0 : i32
    scf.if %2 {
      %cst_12 = arith.constant 0xFF800000 : f32
      %23 = vector.broadcast %cst_12 : f32 to vector<16x1xf32>
      %c0_13 = arith.constant 0 : index
      %c0_14 = arith.constant 0 : index
      %24 = vector.load %arg8[%c0_13, %c0_14] : memref<16x1xf32, #tpu.memory_space<vmem>>, vector<16x1xf32>
      tpu.vector_store %arg8[%c0_13, %c0_14], %23 {strides = array<i32>} : memref<16x1xf32, #tpu.memory_space<vmem>>, vector<16x1xf32>,
      %cst_15 = arith.constant 0.000000e+00 : f32
      %25 = vector.broadcast %cst_15 : f32 to vector<16x1xf32>
      %c0_16 = arith.constant 0 : index
      %c0_17 = arith.constant 0 : index
      %26 = vector.load %arg9[%c0_16, %c0_17] : memref<16x1xf32, #tpu.memory_space<vmem>>, vector<16x1xf32>
      tpu.vector_store %arg9[%c0_16, %c0_17], %25 {strides = array<i32>} : memref<16x1xf32, #tpu.memory_space<vmem>>, vector<16x1xf32>,
      %cst_18 = arith.constant 0.000000e+00 : f32
      %27 = vector.broadcast %cst_18 : f32 to vector<16x1xf32>
      %c0_19 = arith.constant 0 : index
      %c0_20 = arith.constant 0 : index
      %28 = vector.load %arg10[%c0_19, %c0_20] : memref<16x1xf32, #tpu.memory_space<vmem>>, vector<16x1xf32>
      tpu.vector_store %arg10[%c0_19, %c0_20], %27 {strides = array<i32>} : memref<16x1xf32, #tpu.memory_space<vmem>>, vector<16x1xf32>,
    } else {
    }
    %c0 = arith.constant 0 : index
    %c0_1 = arith.constant 0 : index
    %3 = vector.load %arg5[%c0, %c0_1] : memref<16x128xbf16, #tpu.memory_space<vmem>>, vector<16x128xbf16>
    %c0_2 = arith.constant 0 : index
    %c0_3 = arith.constant 0 : index
    %4 = vector.load %arg6[%c0_2, %c0_3] : memref<128x128xbf16, #tpu.memory_space<vmem>>, vector<128x128xbf16>
    %cst = arith.constant dense<0.000000e+00> : vector<16x128xf32>
    %5 = tpu.matmul %3, %4, %cst {dimension_numbers = #tpu.dot_dimension_numbers<[1], [1], [0], [0], [0, 0, 1, 0], [], []>} : vector<16x128xbf16>, vector<128x128xbf16>, vector<16x128xf32> -> vector<16x128xf32>
    %c16_i32 = arith.constant 16 : i32
    %6 = arith.muli %arg0, %c16_i32 : i32
    %c128_i32 = arith.constant 128 : i32
    %7 = arith.muli %arg1, %c128_i32 : i32
    %c128_i32_4 = arith.constant 128 : i32
    %8 = arith.addi %7, %c128_i32_4 : i32
    %9 = arith.cmpi slt, %6, %8 : i32
    %c16_i32_5 = arith.constant 16 : i32
    %10 = arith.addi %6, %c16_i32_5 : i32
    %11 = arith.cmpi slt, %7, %10 : i32
    %12 = arith.andi %9, %11 : i1
    %c0_i32_6 = arith.constant 0 : i32
    %13 = arith.cmpi eq, %arg1, %c0_i32_6 : i32
    %14 = arith.ori %12, %13 : i1
    %true = arith.constant true
    %15 = arith.xori %14, %true : i1
    %16 = arith.extui %15 : i1 to i32
    %c0_i32_7 = arith.constant 0 : i32
    %17 = arith.cmpi ne, %16, %c0_i32_7 : i32
    scf.if %17 {
      %c0_12 = arith.constant 0 : index
      %c0_13 = arith.constant 0 : index
      %23 = vector.load %arg2[%c0_12, %c0_13] : memref<16x1xi32, #tpu.memory_space<vmem>>, vector<16x1xi32>
      %c0_14 = arith.constant 0 : index
      %c0_15 = arith.constant 0 : index
      %24 = vector.load %arg3[%c0_14, %c0_15] : memref<1x128xi32, #tpu.memory_space<vmem>>, vector<1x128xi32>
      %25 = vector.broadcast %23 : vector<16x1xi32> to vector<16x128xi32>
      %26 = vector.broadcast %24 : vector<1x128xi32> to vector<16x128xi32>
      %27 = arith.cmpi eq, %25, %26 : vector<16x128xi32>
      %28 = arith.extui %27 : vector<16x128xi1> to vector<16x128xi32>
      %29 = arith.sitofp %28 : vector<16x128xi32> to vector<16x128xf32>
      %c0_16 = arith.constant 0 : index
      %c0_17 = arith.constant 0 : index
      %30 = vector.load %arg8[%c0_16, %c0_17] : memref<16x1xf32, #tpu.memory_space<vmem>>, vector<16x1xf32>
      %cst_18 = arith.constant dense<0xFF800000> : vector<16xf32>
      %31 = vector.multi_reduction <maximumf>, %5, %cst_18 [1] : vector<16x128xf32> to vector<16xf32>
      %32 = vector.shape_cast %31 : vector<16xf32> to vector<16x1xf32>
      %33 = arith.maximumf %30, %32 : vector<16x1xf32>
      %34 = vector.broadcast %33 : vector<16x1xf32> to vector<16x128xf32>
      %35 = arith.subf %5, %34 : vector<16x128xf32>
      %36 = math.exp %35 : vector<16x128xf32>
      %c0_19 = arith.constant 0 : index
      %c0_20 = arith.constant 0 : index
      %37 = vector.load %arg9[%c0_19, %c0_20] : memref<16x1xf32, #tpu.memory_space<vmem>>, vector<16x1xf32>
      %38 = arith.subf %30, %33 : vector<16x1xf32>
      %39 = math.exp %38 : vector<16x1xf32>
      %40 = arith.mulf %37, %39 : vector<16x1xf32>
      %cst_21 = arith.constant dense<0.000000e+00> : vector<16xf32>
      %41 = vector.multi_reduction <add>, %36, %cst_21 [1] : vector<16x128xf32> to vector<16xf32>
      %42 = vector.shape_cast %41 : vector<16xf32> to vector<16x1xf32>
      %43 = arith.addf %40, %42 : vector<16x1xf32>
      %c0_22 = arith.constant 0 : index
      %c0_23 = arith.constant 0 : index
      %44 = vector.load %arg9[%c0_22, %c0_23] : memref<16x1xf32, #tpu.memory_space<vmem>>, vector<16x1xf32>
      tpu.vector_store %arg9[%c0_22, %c0_23], %43 {strides = array<i32>} : memref<16x1xf32, #tpu.memory_space<vmem>>, vector<16x1xf32>,
      %c0_24 = arith.constant 0 : index
      %c0_25 = arith.constant 0 : index
      %45 = vector.load %arg8[%c0_24, %c0_25] : memref<16x1xf32, #tpu.memory_space<vmem>>, vector<16x1xf32>
      tpu.vector_store %arg8[%c0_24, %c0_25], %33 {strides = array<i32>} : memref<16x1xf32, #tpu.memory_space<vmem>>, vector<16x1xf32>,
      %c0_26 = arith.constant 0 : index
      %c0_27 = arith.constant 0 : index
      %46 = vector.load %arg10[%c0_26, %c0_27] : memref<16x1xf32, #tpu.memory_space<vmem>>, vector<16x1xf32>
      %47 = arith.mulf %29, %5 : vector<16x128xf32>
      %cst_28 = arith.constant dense<0.000000e+00> : vector<16xf32>
      %48 = vector.multi_reduction <add>, %47, %cst_28 [1] : vector<16x128xf32> to vector<16xf32>
      %49 = vector.shape_cast %48 : vector<16xf32> to vector<16x1xf32>
      %50 = arith.addf %46, %49 : vector<16x1xf32>
      %c0_29 = arith.constant 0 : index
      %c0_30 = arith.constant 0 : index
      %51 = vector.load %arg10[%c0_29, %c0_30] : memref<16x1xf32, #tpu.memory_space<vmem>>, vector<16x1xf32>
      tpu.vector_store %arg10[%c0_29, %c0_30], %50 {strides = array<i32>} : memref<16x1xf32, #tpu.memory_space<vmem>>, vector<16x1xf32>,
    } else {
    }
    %18 = arith.extui %14 : i1 to i32
    %cst_8 = arith.constant 0xFF800000 : f32
    %c0_i32_9 = arith.constant 0 : i32
    %19 = arith.cmpi ne, %18, %c0_i32_9 : i32
    scf.if %19 {
      %23 = tpu.iota {dimensions = array<i32: 0>} : vector<16x1xi32>
      %24 = vector.broadcast %6 : i32 to vector<16x1xi32>
      %25 = arith.addi %24, %23 : vector<16x1xi32>
      %26 = tpu.iota {dimensions = array<i32: 1>} : vector<1x128xi32>
      %27 = vector.broadcast %7 : i32 to vector<1x128xi32>
      %28 = arith.addi %27, %26 : vector<1x128xi32>
      %29 = vector.broadcast %25 : vector<16x1xi32> to vector<16x128xi32>
      %30 = vector.broadcast %28 : vector<1x128xi32> to vector<16x128xi32>
      %31 = arith.cmpi ne, %29, %30 : vector<16x128xi32>
      %c16_i32_12 = arith.constant 16 : i32
      %32 = vector.broadcast %c16_i32_12 : i32 to vector<1x128xi32>
      %33 = arith.cmpi slt, %28, %32 : vector<1x128xi32>
      %34 = vector.broadcast %33 : vector<1x128xi1> to vector<16x128xi1>
      %35 = arith.andi %31, %34 : vector<16x128xi1>
      %c0_13 = arith.constant 0 : index
      %c0_14 = arith.constant 0 : index
      %36 = vector.load %arg2[%c0_13, %c0_14] : memref<16x1xi32, #tpu.memory_space<vmem>>, vector<16x1xi32>
      %c0_15 = arith.constant 0 : index
      %c0_16 = arith.constant 0 : index
      %37 = vector.load %arg3[%c0_15, %c0_16] : memref<1x128xi32, #tpu.memory_space<vmem>>, vector<1x128xi32>
      %38 = vector.broadcast %36 : vector<16x1xi32> to vector<16x128xi32>
      %39 = vector.broadcast %37 : vector<1x128xi32> to vector<16x128xi32>
      %40 = arith.cmpi eq, %38, %39 : vector<16x128xi32>
      %41 = arith.andi %40, %35 : vector<16x128xi1>
      %42 = arith.extui %41 : vector<16x128xi1> to vector<16x128xi32>
      %43 = arith.sitofp %42 : vector<16x128xi32> to vector<16x128xf32>
      %44 = vector.broadcast %cst_8 : f32 to vector<16x128xf32>
      %45 = arith.select %35, %5, %44 : vector<16x128xi1>, vector<16x128xf32>
      %c0_17 = arith.constant 0 : index
      %c0_18 = arith.constant 0 : index
      %46 = vector.load %arg8[%c0_17, %c0_18] : memref<16x1xf32, #tpu.memory_space<vmem>>, vector<16x1xf32>
      %cst_19 = arith.constant dense<0xFF800000> : vector<16xf32>
      %47 = vector.multi_reduction <maximumf>, %45, %cst_19 [1] : vector<16x128xf32> to vector<16xf32>
      %48 = vector.shape_cast %47 : vector<16xf32> to vector<16x1xf32>
      %49 = arith.maximumf %46, %48 : vector<16x1xf32>
      %50 = vector.broadcast %cst_8 : f32 to vector<16x1xf32>
      %51 = arith.cmpf oeq, %49, %50 : vector<16x1xf32>
      %cst_20 = arith.constant 0.000000e+00 : f32
      %52 = vector.broadcast %cst_20 : f32 to vector<16x1xf32>
      %53 = arith.select %51, %52, %49 : vector<16x1xi1>, vector<16x1xf32>
      %54 = vector.broadcast %53 : vector<16x1xf32> to vector<16x128xf32>
      %55 = arith.subf %45, %54 : vector<16x128xf32>
      %56 = math.exp %55 : vector<16x128xf32>
      %c0_21 = arith.constant 0 : index
      %c0_22 = arith.constant 0 : index
      %57 = vector.load %arg9[%c0_21, %c0_22] : memref<16x1xf32, #tpu.memory_space<vmem>>, vector<16x1xf32>
      %58 = arith.subf %46, %53 : vector<16x1xf32>
      %59 = math.exp %58 : vector<16x1xf32>
      %60 = arith.mulf %57, %59 : vector<16x1xf32>
      %cst_23 = arith.constant dense<0.000000e+00> : vector<16xf32>
      %61 = vector.multi_reduction <add>, %56, %cst_23 [1] : vector<16x128xf32> to vector<16xf32>
      %62 = vector.shape_cast %61 : vector<16xf32> to vector<16x1xf32>
      %63 = arith.addf %60, %62 : vector<16x1xf32>
      %c0_24 = arith.constant 0 : index
      %c0_25 = arith.constant 0 : index
      %64 = vector.load %arg9[%c0_24, %c0_25] : memref<16x1xf32, #tpu.memory_space<vmem>>, vector<16x1xf32>
      tpu.vector_store %arg9[%c0_24, %c0_25], %63 {strides = array<i32>} : memref<16x1xf32, #tpu.memory_space<vmem>>, vector<16x1xf32>,
      %c0_26 = arith.constant 0 : index
      %c0_27 = arith.constant 0 : index
      %65 = vector.load %arg8[%c0_26, %c0_27] : memref<16x1xf32, #tpu.memory_space<vmem>>, vector<16x1xf32>
      tpu.vector_store %arg8[%c0_26, %c0_27], %49 {strides = array<i32>} : memref<16x1xf32, #tpu.memory_space<vmem>>, vector<16x1xf32>,
      %c0_28 = arith.constant 0 : index
      %c0_29 = arith.constant 0 : index
      %66 = vector.load %arg10[%c0_28, %c0_29] : memref<16x1xf32, #tpu.memory_space<vmem>>, vector<16x1xf32>
      %67 = arith.mulf %43, %5 : vector<16x128xf32>
      %cst_30 = arith.constant dense<0.000000e+00> : vector<16xf32>
      %68 = vector.multi_reduction <add>, %67, %cst_30 [1] : vector<16x128xf32> to vector<16xf32>
      %69 = vector.shape_cast %68 : vector<16xf32> to vector<16x1xf32>
      %70 = arith.addf %66, %69 : vector<16x1xf32>
      %c0_31 = arith.constant 0 : index
      %c0_32 = arith.constant 0 : index
      %71 = vector.load %arg10[%c0_31, %c0_32] : memref<16x1xf32, #tpu.memory_space<vmem>>, vector<16x1xf32>
      tpu.vector_store %arg10[%c0_31, %c0_32], %70 {strides = array<i32>} : memref<16x1xf32, #tpu.memory_space<vmem>>, vector<16x1xf32>,
    } else {
    }
    %c0_i32_10 = arith.constant 0 : i32
    %20 = arith.cmpi eq, %arg1, %c0_i32_10 : i32
    %21 = arith.extui %20 : i1 to i32
    %c0_i32_11 = arith.constant 0 : i32
    %22 = arith.cmpi ne, %21, %c0_i32_11 : i32
    scf.if %22 {
      %c0_12 = arith.constant 0 : index
      %c0_13 = arith.constant 0 : index
      %23 = vector.load %arg8[%c0_12, %c0_13] : memref<16x1xf32, #tpu.memory_space<vmem>>, vector<16x1xf32>
      %c0_14 = arith.constant 0 : index
      %c0_15 = arith.constant 0 : index
      %24 = vector.load %arg9[%c0_14, %c0_15] : memref<16x1xf32, #tpu.memory_space<vmem>>, vector<16x1xf32>
      %25 = math.log %24 : vector<16x1xf32>
      %26 = arith.addf %23, %25 : vector<16x1xf32>
      %c0_16 = arith.constant 0 : index
      %c0_17 = arith.constant 0 : index
      %27 = vector.load %arg10[%c0_16, %c0_17] : memref<16x1xf32, #tpu.memory_space<vmem>>, vector<16x1xf32>
      %c0_18 = arith.constant 0 : index
      %c0_19 = arith.constant 0 : index
      %28 = vector.load %arg4[%c0_18, %c0_19] : memref<16x1xf32, #tpu.memory_space<vmem>>, vector<16x1xf32>
      %29 = arith.mulf %27, %28 : vector<16x1xf32>
      %30 = arith.subf %29, %26 : vector<16x1xf32>
      %cst_20 = arith.constant -1.42857146 : f32
      %31 = vector.broadcast %cst_20 : f32 to vector<16x1xf32>
      %32 = arith.mulf %31, %30 : vector<16x1xf32>
      %c0_21 = arith.constant 0 : index
      %c0_22 = arith.constant 0 : index
      %33 = vector.load %arg7[%c0_21, %c0_22] : memref<16x1xf32, #tpu.memory_space<vmem>>, vector<16x1xf32>
      tpu.vector_store %arg7[%c0_21, %c0_22], %32 {strides = array<i32>} : memref<16x1xf32, #tpu.memory_space<vmem>>, vector<16x1xf32>,
    } else {
    }
    return
  }
  func.func @transform_0(%arg0: i32, %arg1: i32) -> (i32, i32) {
    %c0_i32 = arith.constant 0 : i32
    %c0_i32_0 = arith.constant 0 : i32
    return %arg0, %c0_i32 : i32, i32
  }
  func.func @transform_1(%arg0: i32, %arg1: i32) -> (i32, i32) {
    %c0_i32 = arith.constant 0 : i32
    %c0_i32_0 = arith.constant 0 : i32
    return %c0_i32, %arg1 : i32, i32
  }
  func.func @transform_2(%arg0: i32, %arg1: i32) -> (i32, i32) {
    %c0_i32 = arith.constant 0 : i32
    %c0_i32_0 = arith.constant 0 : i32
    return %arg0, %c0_i32 : i32, i32
  }
  func.func @transform_3(%arg0: i32, %arg1: i32) -> (i32, i32) {
    %c0_i32 = arith.constant 0 : i32
    %c0_i32_0 = arith.constant 0 : i32
    return %arg0, %c0_i32 : i32, i32
  }
  func.func @transform_4(%arg0: i32, %arg1: i32) -> (i32, i32) {
    %c0_i32 = arith.constant 0 : i32
    %c0_i32_0 = arith.constant 0 : i32
    return %arg1, %c0_i32 : i32, i32
  }
  func.func @transform_5(%arg0: i32, %arg1: i32) -> (i32, i32) {
    %c0_i32 = arith.constant 0 : i32
    %c0_i32_0 = arith.constant 0 : i32
    return %arg0, %c0_i32 : i32, i32
  }
}

</mosaic_0001>

<llo_original>
// kernel: tpu_custom_call.1
$region0: #{tpu_custom_call.1}
  #allocation0 [shape = 'u32[]', space=smem, size = 0x4, offset = 0x4, fixed_abs, tag = 'smem constant byte address 0x4 - core index']
  #allocation1 [shape = 'u32[144,128]{1,0:T(1,128)}', space=vmem, size = 0x12000, scoped, tag = 'internal scratch']
  #allocation2 [shape = 'f32[16,1]{1,0:T(8,128)}', space=vmem, size = 0x2000, scoped, tag = 'scratch operand']
  #allocation3 [shape = 'f32[16,1]{1,0:T(8,128)}', space=vmem, size = 0x2000, scoped, tag = 'scratch operand']
  #allocation4 [shape = 'f32[16,1]{1,0:T(8,128)}', space=vmem, size = 0x2000, scoped, tag = 'scratch operand']
  %s0 = inlined_call_operand.vmem [shape: s32[16,1], index: 0, kind: input, shape index: {}]
  %s1 = inlined_call_operand.vmem [shape: s32[1,128], index: 1, kind: input, shape index: {}]
  %s2 = inlined_call_operand.vmem [shape: f32[16,1], index: 2, kind: input, shape index: {}]
  %s3 = inlined_call_operand.vmem [shape: bf16[16,128], index: 3, kind: input, shape index: {}]
  %s4 = inlined_call_operand.hbm [shape: bf16[128,128], index: 4, kind: input, shape index: {}]
  %s5 = inlined_call_operand.vmem [shape: f32[16,1], index: 5, kind: output, shape index: {}]
  %s6 = sld [smem:[#allocation0]]
  $region50: #{tpu_custom_call.1} parent=0
    _
  %s8 = ssub.s32 1, %s6
  %s9 = scalar_select 0, %s8, %s6
  $region1: #{tpu_custom_call.1} parent=0
    #allocation5 [shape = 'u8[32768]{0}', space=vmem, size = 0x8000, scoped, tag = 'input window, operand 4, single buffered']
    #allocation6 [shape = 's32[1]{0}', space=sflag, size = 0x4, scoped, tag = 'scoped memory for tpu_custom_call.1']
    %10 = vsyncpa [#allocation6], 0
    // Predicated region
    $region2: #{tpu_custom_call.1} parent=1 // pred_check
      _
    $region3: #{tpu_custom_call.1} parent=1 // pred_check_branch
      %12 = sbr.rel (0) target = $region5
    $region4: #{tpu_custom_call.1} parent=1 // pred_region
      _
    $region5: #{tpu_custom_call.1} parent=1 // pred_fallthru
      _
    // Predicated region
    $region6: #{tpu_custom_call.1} parent=1 // pred_check
      _
    $region7: #{tpu_custom_call.1} parent=1 // pred_check_branch
      %14 = sbr.rel (0) target = $region9
    $region8: #{tpu_custom_call.1} parent=1 // pred_region
      _
    $region9: #{tpu_custom_call.1} parent=1 // pred_fallthru
      _
    // Predicated region
    $region10: #{tpu_custom_call.1} parent=1 // pred_check
      _
    $region11: #{tpu_custom_call.1} parent=1 // pred_check_branch
      %16 = sbr.rel (0) target = $region13
    $region12: #{tpu_custom_call.1} parent=1 // pred_region
      _
    $region13: #{tpu_custom_call.1} parent=1 // pred_fallthru
      _
    // Predicated region
    $region14: #{tpu_custom_call.1} parent=1 // pred_check
      _
    $region15: #{tpu_custom_call.1} parent=1 // pred_check_branch
      %18 = sbr.rel (0) target = $region17
    $region16: #{tpu_custom_call.1} parent=1 // pred_region
      _
    $region17: #{tpu_custom_call.1} parent=1 // pred_fallthru
      _
    // Predicated region
    $region18: #{tpu_custom_call.1} parent=1 // pred_check
      _
    $region19: #{tpu_custom_call.1} parent=1 // pred_check_branch
      %20 = sbr.rel (0) target = $region21
    $region20: #{tpu_custom_call.1} parent=1 // pred_region
      %s22 = ssub.s32 1024, 1024
      %23 = vsyncadd [#allocation6], %s22
      %s24 = sshll.u32 [#allocation5], 4
      %s25 = int_to_ptr.vmem [resolvable:$true] %s24
      %30 = dma.hbm_to_vmem [thread:$0]  %s4, 1024, %s25, [#allocation6], 64, 64, 4
    $region21: #{tpu_custom_call.1} parent=1 // pred_fallthru
      _
    // Predicated region
    $region22: #{tpu_custom_call.1} parent=1 // pred_check
      _
    $region23: #{tpu_custom_call.1} parent=1 // pred_check_branch
      %32 = sbr.rel (0) target = $region25
    $region24: #{tpu_custom_call.1} parent=1 // pred_region
      %33 = dma.done [#allocation6], 1024
    $region25: #{tpu_custom_call.1} parent=1 // pred_fallthru
      _
    %p35 = scmp.eq.s32.totalorder 0, 0
    // Predicated region
    $region26: #{tpu_custom_call.1} parent=1 // pred_check
      %p36 = pneg %p35
    $region27: #{tpu_custom_call.1} parent=1 // pred_check_branch
      %38 = sbr.rel (%p36) target = $region29
    $region28: #{tpu_custom_call.1} parent=1 // pred_region
      %vm39 = vcmask 7168
      %40 = vst.msk [vmem:[#allocation2] sm:$0xff] %vm39, -inf
      %41 = vst.msk [vmem:[#allocation2 + $0x8] sm:$0xff] %vm39, -inf
      %42 = vst.msk [vmem:[#allocation3] sm:$0xff] %vm39, 0.0
      %43 = vst.msk [vmem:[#allocation3 + $0x8] sm:$0xff] %vm39, 0.0
      %44 = vst.msk [vmem:[#allocation4] sm:$0xff] %vm39, 0.0
      %45 = vst.msk [vmem:[#allocation4 + $0x8] sm:$0xff] %vm39, 0.0
    $region29: #{tpu_custom_call.1} parent=1 // pred_fallthru
      _
    %v46 = vld [vmem:[%s3] sm:$0xf]
    %v47 = vld [vmem:[%s3 + $0x4] sm:$0xf]
    %v48 = vld [vmem:[#allocation5] sm:$0xf]
    %v49 = vld [vmem:[#allocation5 + $0x4] sm:$0xf]
    %v50 = vld [vmem:[#allocation5 + $0x8] sm:$0xf]
    %v51 = vld [vmem:[#allocation5 + $0xc] sm:$0xf]
    %v52 = vld [vmem:[#allocation5 + $0x10] sm:$0xf]
    %v53 = vld [vmem:[#allocation5 + $0x14] sm:$0xf]
    %v54 = vld [vmem:[#allocation5 + $0x18] sm:$0xf]
    %v55 = vld [vmem:[#allocation5 + $0x1c] sm:$0xf]
    %v56 = vld [vmem:[#allocation5 + $0x20] sm:$0xf]
    %v57 = vld [vmem:[#allocation5 + $0x24] sm:$0xf]
    %v58 = vld [vmem:[#allocation5 + $0x28] sm:$0xf]
    %v59 = vld [vmem:[#allocation5 + $0x2c] sm:$0xf]
    %v60 = vld [vmem:[#allocation5 + $0x30] sm:$0xf]
    %v61 = vld [vmem:[#allocation5 + $0x34] sm:$0xf]
    %v62 = vld [vmem:[#allocation5 + $0x38] sm:$0xf]
    %v63 = vld [vmem:[#allocation5 + $0x3c] sm:$0xf]
    %v66 = vunpack.c.l.b16 %v46
    %v67 = vunpack.c.l.b16 %v47
    %v68 = vpack.c.b16 %v67, %v66
    %v86 = vunpack.c.l.b16 %v48
    %v87 = vunpack.c.l.b16 %v49
    %v88 = vunpack.c.l.b16 %v50
    %v89 = vunpack.c.l.b16 %v51
    %v90 = vunpack.c.l.b16 %v52
    %v91 = vunpack.c.l.b16 %v53
    %v92 = vunpack.c.l.b16 %v54
    %v93 = vunpack.c.l.b16 %v55
    %v94 = vunpack.c.l.b16 %v56
    %v95 = vunpack.c.l.b16 %v57
    %v96 = vunpack.c.l.b16 %v58
    %v97 = vunpack.c.l.b16 %v59
    %v98 = vunpack.c.l.b16 %v60
    %v99 = vunpack.c.l.b16 %v61
    %v100 = vunpack.c.l.b16 %v62
    %v101 = vunpack.c.l.b16 %v63
    %v102 = vpack.c.b16 %v87, %v86
    %v103 = vpack.c.b16 %v89, %v88
    %v104 = vpack.c.b16 %v91, %v90
    %v105 = vpack.c.b16 %v93, %v92
    %v106 = vpack.c.b16 %v95, %v94
    %v107 = vpack.c.b16 %v97, %v96
    %v108 = vpack.c.b16 %v99, %v98
    %v109 = vpack.c.b16 %v101, %v100
    %118 = vmatprep.subr.bf16.mxu0 0
    %119 = vmatpush1.bf16.xpose.msra.mxu0 %v109
    %120 = vmatprep.subr.bf16.mxu0 0
    %121 = vmatpush1.bf16.xpose.msra.mxu0 %v108
    %122 = vmatprep.subr.bf16.mxu0 0
    %123 = vmatpush1.bf16.xpose.msra.mxu0 %v107
    %124 = vmatprep.subr.bf16.mxu0 0
    %125 = vmatpush1.bf16.xpose.msra.mxu0 %v106
    %126 = vmatprep.subr.bf16.mxu0 0
    %127 = vmatpush1.bf16.xpose.msra.mxu0 %v105
    %128 = vmatprep.subr.bf16.mxu0 0
    %129 = vmatpush1.bf16.xpose.msra.mxu0 %v104
    %130 = vmatprep.subr.bf16.mxu0 0
    %131 = vmatpush1.bf16.xpose.msra.mxu0 %v103
    %132 = vmatprep.subr.bf16.mxu0 0
    %133 = vmatpush1.bf16.xpose.msra.mxu0 %v102
    %134 = vmatprep.subr.bf16.mxu0 0
    %135 = vmatpush2.bf16.xpose.msra.mxu0 0
    %136 = vmatprep.subr.bf16.mxu0 0
    %137 = vmatpush2.bf16.xpose.msra.mxu0 0
    %138 = vmatprep.subr.bf16.mxu0 0
    %139 = vmatpush2.bf16.xpose.msra.mxu0 0
    %140 = vmatprep.subr.bf16.mxu0 0
    %141 = vmatpush2.bf16.xpose.msra.mxu0 0
    %142 = vmatprep.subr.bf16.mxu0 0
    %143 = vmatpush2.bf16.xpose.msra.mxu0 0
    %144 = vmatprep.subr.bf16.mxu0 0
    %145 = vmatpush2.bf16.xpose.msra.mxu0 0
    %146 = vmatprep.subr.bf16.mxu0 0
    %147 = vmatpush2.bf16.xpose.msra.mxu0 0
    %148 = vmatprep.subr.bf16.mxu0 0
    %149 = vmatpush2.bf16.xpose.msra.mxu0 0
    %150 = vmatprep.mubr.bf16.mxu0 0
    %151 = vmatmul.mubr.bf16.gmra.mxu0 %v68
    %v152 = vpop.f32.mrf.mxu0
    %v153 = vadd.f32 0.0, %v152
    %v154 = vpop.f32.mrf.mxu0
    %v155 = vpop.f32.mrf.mxu0
    %v156 = vadd.f32 0.0, %v155
    %v157 = vpop.f32.mrf.mxu0
    %158 = vdwg.mxu0
    %s159 = smul.u32 0, 16
    %s160 = smul.u32 0, 128
    %s161 = sadd.s32 %s160, 128
    %p162 = scmp.lt.s32.totalorder %s159, %s161
    %s163 = sadd.s32 %s159, 16
    %p164 = scmp.lt.s32.totalorder %s160, %s163
    %p165 = pnand %p162, %p164
    %p166 = pneg %p165
    %p167 = por %p166, %p35
    // Predicated region
    $region30: #{tpu_custom_call.1} parent=1 // pred_check
      %p168 = pneg %p167
    $region31: #{tpu_custom_call.1} parent=1 // pred_check_branch
      %170 = sbr.rel (%p168) target = $region33
    $region32: #{tpu_custom_call.1} parent=1 // pred_region
      %v171 = vlaneseq
      %v172 = vshrl.u32 %v171, 7
      %v173 = vadd.s32 %v172, 8
      %v174 = vstv %s159
      %v175 = vadd.s32 %v174, %v172
      %v176 = vadd.s32 %v174, %v173
      %v177 = vlaneseq
      %v178 = vand.u32 %v177, 127
      %v179 = vstv %s160
      %v180 = vadd.s32 %v179, %v178
      %vm181 = vcmp.ne.s32.totalorder %v175, %v180
      %vm182 = vcmp.ne.s32.totalorder %v176, %v180
      %vm183 = vcmp.lt.s32.totalorder %v180, 16
      %v184 = vsel %vm183, 1, 0
      %vm185 = vcmp.eq.s32.totalorder %v184, 1
      %vm186 = vmand %vm181, %vm185
      %vm187 = vmand %vm182, %vm185
      %v188 = vld [vmem:[%s0] sm:$0xff]
      %v189 = vld [vmem:[%s0 + $0x8] sm:$0xff]
      %v190 = vld [vmem:[%s1] sm:$0x1]
      %191 = vset.pattern.permute.xlu0 0
      %192 = vperm.xlu0 %191, %v188
      %v193 = vpop.permute.xlu0 %192
      %194 = vset.pattern.permute.xlu0 0
      %195 = vperm.xlu0 %194, %v189
      %v196 = vpop.permute.xlu0 %195
      %v197 = vlaneseq
      %v198 = vshrl.u32 %v197, 7
      %v199 = vsub.s32 0, %v198
      %v200 = vrot.slane %v190, %v199
      %vm201 = vcmp.eq.s32.totalorder %v193, %v200
      %vm202 = vcmp.eq.s32.totalorder %v196, %v200
      %vm203 = vmand %vm201, %vm186
      %vm204 = vmand %vm202, %vm187
      %v205 = vsel %vm203, 1, 0
      %v206 = vsel %vm204, 1, 0
      %v207 = vcvt.s32.f32 %v205
      %v208 = vcvt.s32.f32 %v206
      %v209 = vsel %vm186, %v153, -inf
      %v210 = vsel %vm187, %v156, -inf
      %v211 = vld [vmem:[#allocation2] sm:$0xff]
      %v212 = vld [vmem:[#allocation2 + $0x8] sm:$0xff]
      %213 = vmax.xlane.f32.xlu0 %v209
      %v214 = vpop.xlane.xlu0 %213
      %215 = vmax.xlane.f32.xlu0 %v210
      %v216 = vpop.xlane.xlu0 %215
      %v217 = vmax.f32 %v211, %v214
      %v218 = vmax.f32 %v212, %v216
      %vm219 = vcmp.eq.f32.partialorder %v217, -inf
      %vm220 = vcmp.eq.f32.partialorder %v218, -inf
      %v221 = vsel %vm219, 0.0, %v217
      %v222 = vsel %vm220, 0.0, %v218
      %224 = vset.pattern.permute.xlu0 0
      %225 = vperm.xlu0 %224, %v221
      %v226 = vpop.permute.xlu0 %225
      %229 = vset.pattern.permute.xlu0 0
      %230 = vperm.xlu0 %229, %v222
      %v231 = vpop.permute.xlu0 %230
      %v233 = vsub.f32 %v209, %v226
      %v234 = vsub.f32 %v210, %v231
      %v235 = vmul.f32 %v233, 1.442695
      %v236 = vpow.pop %v235
      %v237 = vmul.f32 %v234, 1.442695
      %v238 = vpow.pop %v237
      %v239 = vld [vmem:[#allocation3] sm:$0xff]
      %v240 = vld [vmem:[#allocation3 + $0x8] sm:$0xff]
      %v241 = vsub.f32 %v211, %v221
      %v242 = vsub.f32 %v212, %v222
      %v243 = vmul.f32 %v241, 1.442695
      %v244 = vpow.pop %v243
      %v245 = vmul.f32 %v242, 1.442695
      %v246 = vpow.pop %v245
      %v247 = vmul.f32 %v239, %v244
      %v248 = vmul.f32 %v240, %v246
      %249 = vadd.xlane.f32.xlu0 %v236
      %v250 = vpop.xlane.xlu0 %249
      %251 = vadd.xlane.f32.xlu0 %v238
      %v252 = vpop.xlane.xlu0 %251
      %v253 = vadd.f32 %v247, %v250
      %v254 = vadd.f32 %v248, %v252
      %vm255 = vcmask 7168
      %256 = vst.msk [vmem:[#allocation3] sm:$0xff] %vm255, %v253
      %257 = vst.msk [vmem:[#allocation3 + $0x8] sm:$0xff] %vm255, %v254
      %258 = vst.msk [vmem:[#allocation2] sm:$0xff] %vm255, %v217
      %259 = vst.msk [vmem:[#allocation2 + $0x8] sm:$0xff] %vm255, %v218
      %v260 = vld [vmem:[#allocation4] sm:$0xff]
      %v261 = vld [vmem:[#allocation4 + $0x8] sm:$0xff]
      %v262 = vmul.f32 %v207, %v153
      %v263 = vmul.f32 %v208, %v156
      %264 = vadd.xlane.f32.xlu0 %v262
      %v265 = vpop.xlane.xlu0 %264
      %266 = vadd.xlane.f32.xlu0 %v263
      %v267 = vpop.xlane.xlu0 %266
      %v268 = vadd.f32 %v260, %v265
      %v269 = vadd.f32 %v261, %v267
      %270 = vst.msk [vmem:[#allocation4] sm:$0xff] %vm255, %v268
      %271 = vst.msk [vmem:[#allocation4 + $0x8] sm:$0xff] %vm255, %v269
    $region33: #{tpu_custom_call.1} parent=1 // pred_fallthru
      _
    %p272 = pneg %p167
    // Predicated region
    $region34: #{tpu_custom_call.1} parent=1 // pred_check
      _
    $region35: #{tpu_custom_call.1} parent=1 // pred_check_branch
      %274 = sbr.rel (%p167) target = $region37
    $region36: #{tpu_custom_call.1} parent=1 // pred_region
      %v275 = vld [vmem:[%s0] sm:$0xff]
      %v276 = vld [vmem:[%s0 + $0x8] sm:$0xff]
      %v277 = vld [vmem:[%s1] sm:$0x1]
      %278 = vset.pattern.permute.xlu0 0
      %279 = vperm.xlu0 %278, %v275
      %v280 = vpop.permute.xlu0 %279
      %281 = vset.pattern.permute.xlu0 0
      %282 = vperm.xlu0 %281, %v276
      %v283 = vpop.permute.xlu0 %282
      %v284 = vlaneseq
      %v285 = vshrl.u32 %v284, 7
      %v286 = vsub.s32 0, %v285
      %v287 = vrot.slane %v277, %v286
      %vm288 = vcmp.eq.s32.totalorder %v280, %v287
      %vm289 = vcmp.eq.s32.totalorder %v283, %v287
      %v290 = vsel %vm288, 1, 0
      %v291 = vsel %vm289, 1, 0
      %v292 = vcvt.s32.f32 %v290
      %v293 = vcvt.s32.f32 %v291
      %v294 = vld [vmem:[#allocation2] sm:$0xff]
      %v295 = vld [vmem:[#allocation2 + $0x8] sm:$0xff]
      %296 = vmax.xlane.f32.xlu0 %v153
      %v297 = vpop.xlane.xlu0 %296
      %298 = vmax.xlane.f32.xlu0 %v156
      %v299 = vpop.xlane.xlu0 %298
      %v300 = vmax.f32 %v294, %v297
      %v301 = vmax.f32 %v295, %v299
      %303 = vset.pattern.permute.xlu0 0
      %304 = vperm.xlu0 %303, %v300
      %v305 = vpop.permute.xlu0 %304
      %308 = vset.pattern.permute.xlu0 0
      %309 = vperm.xlu0 %308, %v301
      %v310 = vpop.permute.xlu0 %309
      %v312 = vsub.f32 %v153, %v305
      %v313 = vsub.f32 %v156, %v310
      %v314 = vmul.f32 %v312, 1.442695
      %v315 = vpow.pop %v314
      %v316 = vmul.f32 %v313, 1.442695
      %v317 = vpow.pop %v316
      %v318 = vld [vmem:[#allocation3] sm:$0xff]
      %v319 = vld [vmem:[#allocation3 + $0x8] sm:$0xff]
      %v320 = vsub.f32 %v294, %v300
      %v321 = vsub.f32 %v295, %v301
      %v322 = vmul.f32 %v320, 1.442695
      %v323 = vpow.pop %v322
      %v324 = vmul.f32 %v321, 1.442695
      %v325 = vpow.pop %v324
      %v326 = vmul.f32 %v318, %v323
      %v327 = vmul.f32 %v319, %v325
      %328 = vadd.xlane.f32.xlu0 %v315
      %v329 = vpop.xlane.xlu0 %328
      %330 = vadd.xlane.f32.xlu0 %v317
      %v331 = vpop.xlane.xlu0 %330
      %v332 = vadd.f32 %v326, %v329
      %v333 = vadd.f32 %v327, %v331
      %vm334 = vcmask 7168
      %335 = vst.msk [vmem:[#allocation3] sm:$0xff] %vm334, %v332
      %336 = vst.msk [vmem:[#allocation3 + $0x8] sm:$0xff] %vm334, %v333
      %337 = vst.msk [vmem:[#allocation2] sm:$0xff] %vm334, %v300
      %338 = vst.msk [vmem:[#allocation2 + $0x8] sm:$0xff] %vm334, %v301
      %v339 = vld [vmem:[#allocation4] sm:$0xff]
      %v340 = vld [vmem:[#allocation4 + $0x8] sm:$0xff]
      %v341 = vmul.f32 %v292, %v153
      %v342 = vmul.f32 %v293, %v156
      %343 = vadd.xlane.f32.xlu0 %v341
      %v344 = vpop.xlane.xlu0 %343
      %345 = vadd.xlane.f32.xlu0 %v342
      %v346 = vpop.xlane.xlu0 %345
      %v347 = vadd.f32 %v339, %v344
      %v348 = vadd.f32 %v340, %v346
      %349 = vst.msk [vmem:[#allocation4] sm:$0xff] %vm334, %v347
      %350 = vst.msk [vmem:[#allocation4 + $0x8] sm:$0xff] %vm334, %v348
    $region37: #{tpu_custom_call.1} parent=1 // pred_fallthru
      _
    // Predicated region
    $region38: #{tpu_custom_call.1} parent=1 // pred_check
      %p351 = pneg %p35
    $region39: #{tpu_custom_call.1} parent=1 // pred_check_branch
      %353 = sbr.rel (%p351) target = $region41
    $region40: #{tpu_custom_call.1} parent=1 // pred_region
      %v354 = vld [vmem:[#allocation2] sm:$0xff]
      %v355 = vld [vmem:[#allocation2 + $0x8] sm:$0xff]
      %v356 = vld [vmem:[#allocation3] sm:$0xff]
      %v357 = vld [vmem:[#allocation3 + $0x8] sm:$0xff]
      %v358 = vlog2.pop %v356
      %v359 = vmul.f32 %v358, 0.6931472
      %v360 = vlog2.pop %v357
      %v361 = vmul.f32 %v360, 0.6931472
      %v362 = vadd.f32 %v354, %v359
      %v363 = vadd.f32 %v355, %v361
      %v364 = vld [vmem:[#allocation4] sm:$0xff]
      %v365 = vld [vmem:[#allocation4 + $0x8] sm:$0xff]
      %v366 = vld [vmem:[%s2] sm:$0xff]
      %v367 = vld [vmem:[%s2 + $0x8] sm:$0xff]
      %v368 = vmul.f32 %v364, %v366
      %v369 = vmul.f32 %v365, %v367
      %v370 = vsub.f32 %v368, %v362
      %v371 = vsub.f32 %v369, %v363
      %v372 = vmul.f32 %v370, -1.4285715
      %v373 = vmul.f32 %v371, -1.4285715
      %vm374 = vcmask 7168
      %375 = vst.msk [vmem:[%s5] sm:$0xff] %vm374, %v372
      %376 = vst.msk [vmem:[%s5 + $0x8] sm:$0xff] %vm374, %v373
    $region41: #{tpu_custom_call.1} parent=1 // pred_fallthru
      _
    // Predicated region
    $region42: #{tpu_custom_call.1} parent=1 // pred_check
      _
    $region43: #{tpu_custom_call.1} parent=1 // pred_check_branch
      %378 = sbr.rel (0) target = $region45
    $region44: #{tpu_custom_call.1} parent=1 // pred_region
      _
    $region45: #{tpu_custom_call.1} parent=1 // pred_fallthru
      _
    // Predicated region
    $region46: #{tpu_custom_call.1} parent=1 // pred_check
      _
    $region47: #{tpu_custom_call.1} parent=1 // pred_check_branch
      %380 = sbr.rel (0) target = $region49
    $region48: #{tpu_custom_call.1} parent=1 // pred_region
      _
    $region49: #{tpu_custom_call.1} parent=1 // pred_fallthru
      _
    %381 = vsyncpa [#allocation6], 1

</llo_original>
